<compile_context>
chip_gen: v7x
topology: tpu7x:2x2x1
jax: 0.10.0
libtpu: 0.0.40
codegen_flags: <defaults>
</compile_context>

<pallas_src>
import jax
import jax.numpy as jnp
from jax.experimental import pallas as pl
from jax.experimental.pallas import tpu as pltpu


def _dot_kernel(e_ref, a_ref, o_ref):
    # e_ref: (num_bands, num_endm) resident in VMEM
    # a_ref: (num_endm, TN)        pixel tile
    # o_ref: (num_bands, TN)       pixel tile
    o_ref[...] = jnp.dot(
        e_ref[...], a_ref[...], preferred_element_type=jnp.float32
    ).astype(o_ref.dtype)


def _default_tn_max():
    # Generation-aware pixel-tile cap, chosen to stay under the scoped-VMEM
    # default (v5e: 16 MiB, v6e/v7x: 32 MiB) with double buffering.
    try:
        kind = jax.devices()[0].device_kind.lower()
    except Exception:
        return 16384
    if any(tag in kind for tag in ("v6", "v7", "7x")):
        return 32768
    return 16384


def dot_torch_forward(E_input, A_input, *, tn_max=None):
    """Pallas equivalent of Dot_torch.forward([E_input, A_input]).

    E_input: (1, num_bands, num_endm)
    A_input: (1, num_endm, H, W)
    returns: (1, num_bands, H, W)
    """
    assert E_input.shape[0] == 1 and A_input.shape[0] == 1
    _, num_bands, num_endm = E_input.shape
    _, num_endm_a, H, W = A_input.shape
    assert num_endm == num_endm_a

    out_dtype = jnp.result_type(E_input.dtype, A_input.dtype)

    # E is tiny (num_bands x num_endm): cast only E to the output dtype.
    e2d = E_input[0].astype(out_dtype)
    # Contiguous reshape only; A keeps its native dtype (no extra HBM pass).
    a2d = A_input[0].reshape(num_endm, H * W)

    hw = H * W
    hw_128 = ((hw + 127) // 128) * 128

    if tn_max is None:
        tn_max = _default_tn_max()
    tn_max = max(128, (tn_max // 128) * 128)

    TN = min(tn_max, hw_128)
    if hw_128 <= tn_max and hw_128 >= 2 * 128:
        # Whole image would be a single tile -> split into two balanced,
        # 128-aligned tiles so v7x can shard the "parallel" axis across its two
        # TensorCores and the pipeline has something to overlap.
        TN = ((hw_128 // 2 + 127) // 128) * 128

    grid = (pl.cdiv(hw, TN),)

    esize = jnp.dtype(e2d.dtype).itemsize
    asize = jnp.dtype(a2d.dtype).itemsize
    osize = jnp.dtype(out_dtype).itemsize
    cost = pl.CostEstimate(
        flops=2 * num_bands * num_endm * hw,
        transcendentals=0,
        bytes_accessed=(
            num_bands * num_endm * esize
            + num_endm * hw * asize
            + num_bands * hw * osize
        ),
    )

    out2d = pl.pallas_call(
        _dot_kernel,
        out_shape=jax.ShapeDtypeStruct((num_bands, hw), out_dtype),
        grid=grid,
        in_specs=[
            # E: resident (constant block index -> DMA'd once).
            pl.BlockSpec((num_bands, num_endm), lambda j: (0, 0)),
            # A: one lane-dense pixel tile per grid step (last tile may be ragged).
            pl.BlockSpec((num_endm, TN), lambda j: (0, j)),
        ],
        out_specs=pl.BlockSpec((num_bands, TN), lambda j: (0, j)),
        compiler_params=pltpu.CompilerParams(
            dimension_semantics=("parallel",),
        ),
        cost_estimate=cost,
    )(e2d, a2d)

    return out2d.reshape(1, num_bands, H, W)


def _reference(E_input, A_input):
    # Same semantics as torch.tensordot(E_input, A_input[0], dims=1).
    return jnp.tensordot(E_input, A_input[0], axes=1)


if __name__ == "__main__":
    key = jax.random.PRNGKey(0)
    keys = jax.random.split(key, 6)

    num_bands, num_endm = 32, 4

    # Case 1: module-scale image (16x16); pixel count a multiple of 128.
    H1, W1 = 16, 16
    E1 = jax.random.normal(keys[0], (1, num_bands, num_endm), dtype=jnp.float32)
    A1 = jax.random.normal(keys[1], (1, num_endm, H1, W1), dtype=jnp.float32)
    out1 = jax.block_until_ready(dot_torch_forward(E1, A1))
    ref1 = _reference(E1, A1)
    assert out1.shape == (1, num_bands, H1, W1)
    assert jnp.allclose(out1, ref1, atol=1e-5, rtol=1e-5)

    # Case 2: pixel count NOT a multiple of 128 -> exercises the masked final tile.
    H2, W2 = 20, 20
    E2 = jax.random.normal(keys[2], (1, num_bands, num_endm), dtype=jnp.float32)
    A2 = jax.random.normal(keys[3], (1, num_endm, H2, W2), dtype=jnp.float32)
    out2 = jax.block_until_ready(dot_torch_forward(E2, A2))
    ref2 = _reference(E2, A2)
    assert out2.shape == (1, num_bands, H2, W2)
    assert jnp.allclose(out2, ref2, atol=1e-5, rtol=1e-5)

    # Case 3: larger image, two full lane-dense tiles.
    H3, W3 = 64, 64
    E3 = jax.random.normal(keys[4], (1, num_bands, num_endm), dtype=jnp.float32)
    A3 = jax.random.normal(keys[5], (1, num_endm, H3, W3), dtype=jnp.float32)
    out3 = jax.block_until_ready(dot_torch_forward(E3, A3))
    ref3 = _reference(E3, A3)
    assert out3.shape == (1, num_bands, H3, W3)
    assert jnp.allclose(out3, ref3, atol=1e-5, rtol=1e-5)

    print("KERNEL_OK")
</pallas_src>

<mosaic_0001>
module attributes {stable_mosaic.version = 11 : i64} {
  func.func @_dot_kernel(%arg0: i32, %arg1: memref<32x4xf32, #tpu.memory_space<vmem>>, %arg2: memref<4x128xf32, #tpu.memory_space<vmem>>, %arg3: memref<32x128xf32, #tpu.memory_space<vmem>>) attributes {dimension_semantics = [#tpu.dimension_semantics<parallel>], iteration_bounds = array<i64: 2>, scalar_prefetch = 0 : i64, scratch_operands = 0 : i64, tpu.core_type = #tpu.core_type<tc>, window_params = [{pipeline_mode = #tpu.pipeline_mode<synchronous>, transform_indices = @transform_0, window_bounds = array<i64: 32, 4>}, {transform_indices = @transform_1, window_bounds = array<i64: 4, 128>}, {transform_indices = @transform_2, window_bounds = array<i64: 32, 128>}]} {
    %c0 = arith.constant 0 : index
    %c0_0 = arith.constant 0 : index
    %0 = vector.load %arg1[%c0, %c0_0] : memref<32x4xf32, #tpu.memory_space<vmem>>, vector<32x4xf32>
    %c0_1 = arith.constant 0 : index
    %c0_2 = arith.constant 0 : index
    %1 = vector.load %arg2[%c0_1, %c0_2] : memref<4x128xf32, #tpu.memory_space<vmem>>, vector<4x128xf32>
    %cst = arith.constant dense<0.000000e+00> : vector<32x128xf32>
    %2 = tpu.matmul %0, %1, %cst {dimension_numbers = #tpu.dot_dimension_numbers<[1], [0], [0], [1], [0, 0, 1, 1], [], []>} : vector<32x4xf32>, vector<4x128xf32>, vector<32x128xf32> -> vector<32x128xf32>
    %c0_3 = arith.constant 0 : index
    %c0_4 = arith.constant 0 : index
    %3 = vector.load %arg3[%c0_3, %c0_4] : memref<32x128xf32, #tpu.memory_space<vmem>>, vector<32x128xf32>
    tpu.vector_store %arg3[%c0_3, %c0_4], %2 {strides = array<i32>} : memref<32x128xf32, #tpu.memory_space<vmem>>, vector<32x128xf32>,
    return
  }
  func.func @transform_0(%arg0: i32) -> (i32, i32) {
    %c0_i32 = arith.constant 0 : i32
    %c0_i32_0 = arith.constant 0 : i32
    %c0_i32_1 = arith.constant 0 : i32
    return %c0_i32, %c0_i32_0 : i32, i32
  }
  func.func @transform_1(%arg0: i32) -> (i32, i32) {
    %c0_i32 = arith.constant 0 : i32
    %c0_i32_0 = arith.constant 0 : i32
    return %c0_i32, %arg0 : i32, i32
  }
  func.func @transform_2(%arg0: i32) -> (i32, i32) {
    %c0_i32 = arith.constant 0 : i32
    %c0_i32_0 = arith.constant 0 : i32
    return %c0_i32, %arg0 : i32, i32
  }
}

</mosaic_0001>

<llo_original>
// kernel: tpu_custom_call.1
$region0: #{tpu_custom_call.1}
  #allocation0 [shape = 'u32[]', space=smem, size = 0x4, offset = 0x4, fixed_abs, tag = 'smem constant byte address 0x4 - core index']
  #allocation1 [shape = 'u32[144,128]{1,0:T(1,128)}', space=vmem, size = 0x12000, scoped, tag = 'internal scratch']
  %s0 = inlined_call_operand.vmem [shape: f32[32,4], index: 0, kind: input, shape index: {}]
  %s1 = inlined_call_operand.vmem [shape: f32[4,256], index: 1, kind: input, shape index: {}]
  %s2 = inlined_call_operand.hbm [shape: f32[32,256], index: 2, kind: output, shape index: {}]
  %s3 = sld [smem:[#allocation0]]
  $region41: #{tpu_custom_call.1} parent=0
    _
  %s5 = ssub.s32 1, %s3
  %s6 = scalar_select 0, %s5, %s3
  $region1: #{tpu_custom_call.1} parent=0
    #allocation2 [shape = 'u8[32768]{0}', space=vmem, size = 0x8000, scoped, tag = 'output window, operand 0']
    #allocation3 [shape = 's32[2]{0}', space=sflag, size = 0x8, scoped, tag = 'scoped memory for tpu_custom_call.1']
    %7 = vsyncpa [#allocation3], 0
    %s8 = scalar_lea.sflag [#allocation3], 1
    %9 = vsyncpa %s8, 0
    loop: start=0, step=1, limit=4
    $region2: #{tpu_custom_call.1} parent=1 // loop_pre_header
      _
    $region3: #{tpu_custom_call.1} parent=1 // loop_header
      %s11 = sphi 0, %s15
      %p12 = scmp.ge.s32.totalorder %s11, 4
      %s19 = sphi 0, %s19
      %s21 = sphi 0, %s19
      %s22 = sphi 0, %s21
      %s36 = sphi 0, %s22
      %s42 = sphi 0, %s44
      %s45 = sphi 0, %s42
      %s46 = sphi 0, %s45
      %s62 = sphi 0, %s46
      %s68 = sphi 0, %s70
      %s71 = sphi 0, %s68
      %s72 = sphi 0, %s71
      %s88 = sphi 0, %s72
    $region4: #{tpu_custom_call.1} parent=1 // loop_header_branch
      %14 = sbr.rel (%p12) target = $region8
    $region5: #{tpu_custom_call.1} parent=1 // loop_body
      %s16 = ssub.s32 %s11, 1
      %s17 = ssub.s32 %s11, 2
      %s18 = sadd.s32 %s11, 1
      %s20 = sadd.s32 %s19, 1
      %p23 = scmp.eq.s32.totalorder %s11, 1
      %p24 = scmp.ne.s32.totalorder %s19, %s21
      %p25 = scmp.eq.s32.totalorder %s11, 0
      %p26 = por %p24, %p25
      %p27 = scmp.ne.s32.totalorder %s19, %s21
      %p28 = scmp.eq.s32.totalorder %s16, 1
      %p29 = por %p27, %p28
      %p30 = scmp.ne.s32.totalorder %s21, %s22
      %p31 = scmp.eq.s32.totalorder %s16, 0
      %p32 = por %p30, %p31
      %p33 = scmp.ne.s32.totalorder %s21, %s22
      %p34 = scmp.eq.s32.totalorder %s17, 1
      %p35 = por %p33, %p34
      %p37 = scmp.ne.s32.totalorder %s22, %s36
      %p38 = scmp.eq.s32.totalorder %s17, 0
      %p39 = por %p37, %p38
      %s40 = ssub.s32 %s11, %s18
      %p41 = scmp.eq.s32.totalorder %s40, 0
      %s43 = sadd.s32 %s42, 1
      %s44 = scalar_select %p41, %s42, %s43
      %p47 = pneg %p41
      %p48 = scmp.eq.s32.totalorder %s11, 1
      %p49 = por %p47, %p48
      %p50 = scmp.ne.s32.totalorder %s42, %s45
      %p51 = scmp.eq.s32.totalorder %s11, 0
      %p52 = por %p50, %p51
      %p53 = scmp.ne.s32.totalorder %s42, %s45
      %p54 = scmp.eq.s32.totalorder %s16, 1
      %p55 = por %p53, %p54
      %p56 = scmp.ne.s32.totalorder %s45, %s46
      %p57 = scmp.eq.s32.totalorder %s16, 0
      %p58 = por %p56, %p57
      %p59 = scmp.ne.s32.totalorder %s45, %s46
      %p60 = scmp.eq.s32.totalorder %s17, 1
      %p61 = por %p59, %p60
      %p63 = scmp.ne.s32.totalorder %s46, %s62
      %p64 = scmp.eq.s32.totalorder %s17, 0
      %p65 = por %p63, %p64
      %s66 = ssub.s32 %s11, %s18
      %p67 = scmp.eq.s32.totalorder %s66, 0
      %s69 = sadd.s32 %s68, 1
      %s70 = scalar_select %p67, %s68, %s69
      %p73 = pneg %p67
      %p74 = scmp.eq.s32.totalorder %s11, 1
      %p75 = por %p73, %p74
      %p76 = scmp.ne.s32.totalorder %s68, %s71
      %p77 = scmp.eq.s32.totalorder %s11, 0
      %p78 = por %p76, %p77
      %p79 = scmp.ne.s32.totalorder %s68, %s71
      %p80 = scmp.eq.s32.totalorder %s16, 1
      %p81 = por %p79, %p80
      %p82 = scmp.ne.s32.totalorder %s71, %s72
      %p83 = scmp.eq.s32.totalorder %s16, 0
      %p84 = por %p82, %p83
      %p85 = scmp.ne.s32.totalorder %s71, %s72
      %p86 = scmp.eq.s32.totalorder %s17, 1
      %p87 = por %p85, %p86
      %p89 = scmp.ne.s32.totalorder %s72, %s88
      %p90 = scmp.eq.s32.totalorder %s17, 0
      %p91 = por %p89, %p90
      %p92 = scmp.le.s32.totalorder 1, %s11
      %p93 = scmp.lt.s32.totalorder %s11, 3
      %p94 = pnand %p92, %p93
      %p95 = pneg %p94
      // Predicated region
      $region9: #{tpu_custom_call.1} parent=5 // pred_check
        _
      $region10: #{tpu_custom_call.1} parent=5 // pred_check_branch
        %97 = sbr.rel (%p94) target = $region12
      $region11: #{tpu_custom_call.1} parent=5 // pred_region
        %s98 = ssub.s32 %s11, 1
        // Predicated region
        $region13: #{tpu_custom_call.1} parent=11 // pred_check
          %p99 = pneg %p32
        $region14: #{tpu_custom_call.1} parent=11 // pred_check_branch
          %101 = sbr.rel (%p99) target = $region16
        $region15: #{tpu_custom_call.1} parent=11 // pred_region
          _
        $region16: #{tpu_custom_call.1} parent=11 // pred_fallthru
          _
      $region12: #{tpu_custom_call.1} parent=5 // pred_fallthru
        _
      %p102 = scmp.lt.s32.totalorder %s11, 2
      // Predicated region
      $region17: #{tpu_custom_call.1} parent=5 // pred_check
        %p103 = pneg %p102
      $region18: #{tpu_custom_call.1} parent=5 // pred_check_branch
        %105 = sbr.rel (%p103) target = $region20
      $region19: #{tpu_custom_call.1} parent=5 // pred_region
        // Predicated region
        $region21: #{tpu_custom_call.1} parent=19 // pred_check
          %p106 = pneg %p52
        $region22: #{tpu_custom_call.1} parent=19 // pred_check_branch
          %108 = sbr.rel (%p106) target = $region24
        $region23: #{tpu_custom_call.1} parent=19 // pred_region
          %p109 = scmp.lt.s32.totalorder %s11, 1
          %s110 = scalar_select %p109, %s11, 1
          %s111 = smul.addr %s110, 4
          %s112 = scalar_lea.vmem %s1, %s111
        $region24: #{tpu_custom_call.1} parent=19 // pred_fallthru
          _
      $region20: #{tpu_custom_call.1} parent=5 // pred_fallthru
        _
      %p113 = scmp.le.s32.totalorder 1, %s11
      %p114 = scmp.lt.s32.totalorder %s11, 3
      %p115 = pnand %p113, %p114
      %p116 = pneg %p115
      // Predicated region
      $region25: #{tpu_custom_call.1} parent=5 // pred_check
        _
      $region26: #{tpu_custom_call.1} parent=5 // pred_check_branch
        %118 = sbr.rel (%p115) target = $region28
      $region27: #{tpu_custom_call.1} parent=5 // pred_region
        %s119 = ssub.s32 %s11, 1
        %p120 = pneg %p32
        %p121 = pneg %p29
        %p122 = scmp.lt.s32.totalorder %s16, 1
        %s123 = scalar_select %p122, %s16, 1
        %s124 = smul.addr %s123, 4
        %s125 = scalar_lea.vmem %s1, %s124
        %p126 = pneg %p58
        %p127 = pneg %p55
        %p128 = pneg %p84
        %p129 = pneg %p81
        %s130 = sand.u32 %s71, 1
        %s131 = scalar_lea.sflag [#allocation3], %s130
        %s132 = sand.u32 %s71, 1
        %s133 = smul.addr %s132, 32
        %s134 = scalar_lea.vmem [#allocation2], %s133
        %p135 = scmp.lt.s32.totalorder %s16, 1
        %s136 = scalar_select %p135, %s16, 1
        %s137 = smul.addr %s136, 4
        %s138 = scalar_lea.vmem %s1, %s137
        %v139 = vld [vmem:[%s0] sm:$0xff]
        %v140 = vld [vmem:[%s0 + $0x8] sm:$0xff]
        %v141 = vld [vmem:[%s0 + $0x10] sm:$0xff]
        %v142 = vld [vmem:[%s0 + $0x18] sm:$0xff]
        %v143 = vld [vmem:[%s138] sm:$0xf]
        %vm144 = vcmask 31744
        %v146 = vsel %vm144, %v139, 0
        %v149 = vsel %vm144, %v140, 0
        %v152 = vsel %vm144, %v141, 0
        %v155 = vsel %vm144, %v142, 0
        %vm157 = vcmask 1043456
        %v159 = vsel %vm157, %v143, 0
        %161 = vmatprep.subr.mxu0 0.0
        %162 = vmatpush1.msra.mxu0 %v159
        %163 = vmatprep.subr.mxu0 0.0
        %164 = vmatpush1.msra.mxu0 0.0
        %165 = vmatprep.subr.mxu0 0.0
        %166 = vmatpush1.msra.mxu0 0.0
        %167 = vmatprep.subr.mxu0 0.0
        %168 = vmatpush1.msra.mxu0 0.0
        %169 = vmatprep.subr.mxu0 0.0
        %170 = vmatpush1.msra.mxu0 0.0
        %171 = vmatprep.subr.mxu0 0.0
        %172 = vmatpush1.msra.mxu0 0.0
        %173 = vmatprep.subr.mxu0 0.0
        %174 = vmatpush1.msra.mxu0 0.0
        %175 = vmatprep.subr.mxu0 0.0
        %176 = vmatpush1.msra.mxu0 0.0
        %177 = vmatprep.subr.mxu0 0.0
        %178 = vmatpush1.msra.mxu0 0.0
        %179 = vmatprep.subr.mxu0 0.0
        %180 = vmatpush1.msra.mxu0 0.0
        %181 = vmatprep.subr.mxu0 0.0
        %182 = vmatpush1.msra.mxu0 0.0
        %183 = vmatprep.subr.mxu0 0.0
        %184 = vmatpush1.msra.mxu0 0.0
        %185 = vmatprep.subr.mxu0 0.0
        %186 = vmatpush1.msra.mxu0 0.0
        %187 = vmatprep.subr.mxu0 0.0
        %188 = vmatpush1.msra.mxu0 0.0
        %189 = vmatprep.subr.mxu0 0.0
        %190 = vmatpush1.msra.mxu0 0.0
        %191 = vmatprep.subr.mxu0 0.0
        %192 = vmatpush1.msra.mxu0 0.0
        %193 = vmatprep.subr.mxu0 0.0
        %194 = vmatpush1.msra.mxu0 0.0
        %195 = vmatprep.subr.mxu0 0.0
        %196 = vmatpush1.msra.mxu0 0.0
        %197 = vmatprep.subr.mxu0 0.0
        %198 = vmatpush1.msra.mxu0 0.0
        %199 = vmatprep.subr.mxu0 0.0
        %200 = vmatpush1.msra.mxu0 0.0
        %201 = vmatprep.subr.mxu0 0.0
        %202 = vmatpush1.msra.mxu0 0.0
        %203 = vmatprep.subr.mxu0 0.0
        %204 = vmatpush1.msra.mxu0 0.0
        %205 = vmatprep.subr.mxu0 0.0
        %206 = vmatpush1.msra.mxu0 0.0
        %207 = vmatprep.subr.mxu0 0.0
        %208 = vmatpush1.msra.mxu0 0.0
        %209 = vmatprep.subr.mxu0 0.0
        %210 = vmatpush1.msra.mxu0 0.0
        %211 = vmatprep.subr.mxu0 0.0
        %212 = vmatpush1.msra.mxu0 0.0
        %213 = vmatprep.subr.mxu0 0.0
        %214 = vmatpush1.msra.mxu0 0.0
        %215 = vmatprep.subr.mxu0 0.0
        %216 = vmatpush1.msra.mxu0 0.0
        %217 = vmatprep.subr.mxu0 0.0
        %218 = vmatpush1.msra.mxu0 0.0
        %219 = vmatprep.subr.mxu0 0.0
        %220 = vmatpush1.msra.mxu0 0.0
        %221 = vmatprep.subr.mxu0 0.0
        %222 = vmatpush1.msra.mxu0 0.0
        %223 = vmatprep.subr.mxu0 0.0
        %224 = vmatpush1.msra.mxu0 0.0
        %225 = vmatprep.mubr.f32.mxu0 0.0
        %226 = vmatmul.mubr.f32.gmra.mrb[0].mxu0 %v146
        %v227 = vpop.f32.mrb[0].mxu0
        %v228 = vadd.f32 0.0, %v227
        %v229 = vpop.f32.mrb[0].mxu0
        %230 = vmatprep.mubr.f32.mxu0 0.0
        %231 = vmatmul.mubr.f32.gmra.mrb[0].mxu0 %v149
        %v232 = vpop.f32.mrb[0].mxu0
        %v233 = vadd.f32 0.0, %v232
        %v234 = vpop.f32.mrb[0].mxu0
        %235 = vmatprep.mubr.f32.mxu0 0.0
        %236 = vmatmul.mubr.f32.gmra.mrb[0].mxu0 %v152
        %v237 = vpop.f32.mrb[0].mxu0
        %v238 = vadd.f32 0.0, %v237
        %v239 = vpop.f32.mrb[0].mxu0
        %240 = vmatprep.mubr.f32.mxu0 0.0
        %241 = vmatmul.mubr.f32.gmra.mrb[0].mxu0 %v155
        %v242 = vpop.f32.mrb[0].mxu0
        %v243 = vadd.f32 0.0, %v242
        %v244 = vpop.f32.mrb[0].mxu0
        %245 = vdwg.mxu0
        %246 = vst [vmem:[%s134] sm:$0xff] %v228
        %247 = vst [vmem:[%s134 + $0x8] sm:$0xff] %v233
        %248 = vst [vmem:[%s134 + $0x10] sm:$0xff] %v238
        %249 = vst [vmem:[%s134 + $0x18] sm:$0xff] %v243
        %s250 = sand.u32 %s71, 1
        %s251 = scalar_lea.sflag [#allocation3], %s250
        %s252 = sand.u32 %s71, 1
        %s253 = smul.addr %s252, 32
        %s254 = scalar_lea.vmem [#allocation2], %s253
        // Predicated region
        $region29: #{tpu_custom_call.1} parent=27 // pred_check
          %p255 = pneg %p81
        $region30: #{tpu_custom_call.1} parent=27 // pred_check_branch
          %257 = sbr.rel (%p255) target = $region32
        $region31: #{tpu_custom_call.1} parent=27 // pred_region
          %s259 = ssub.s32 512, 512
          %260 = vsyncadd %s251, %s259
          %s261 = smul.addr %s16, 128
          %s262 = scalar_lea.hbm %s2, %s261
          %s263 = sshll.u32 %s254, 4
          %s264 = int_to_ptr.vmem [resolvable:$true] %s263
          %269 = dma.vmem_to_hbm [thread:$0]  %s264, 512, %s262, %s251, 128, 256, 8
        $region32: #{tpu_custom_call.1} parent=27 // pred_fallthru
          _
      $region28: #{tpu_custom_call.1} parent=5 // pred_fallthru
        _
      %p270 = scmp.le.s32.totalorder 2, %s11
      // Predicated region
      $region33: #{tpu_custom_call.1} parent=5 // pred_check
        %p271 = pneg %p270
      $region34: #{tpu_custom_call.1} parent=5 // pred_check_branch
        %273 = sbr.rel (%p271) target = $region36
      $region35: #{tpu_custom_call.1} parent=5 // pred_region
        %s274 = ssub.s32 %s11, 2
        // Predicated region
        $region37: #{tpu_custom_call.1} parent=35 // pred_check
          %p275 = pneg %p87
        $region38: #{tpu_custom_call.1} parent=35 // pred_check_branch
          %277 = sbr.rel (%p275) target = $region40
        $region39: #{tpu_custom_call.1} parent=35 // pred_region
          %s278 = sand.u32 %s72, 1
          %s279 = scalar_lea.sflag [#allocation3], %s278
          %s280 = sand.u32 %s72, 1
          %s281 = smul.addr %s280, 32
          %s282 = scalar_lea.vmem [#allocation2], %s281
          %283 = dma.done %s279, 512
        $region40: #{tpu_custom_call.1} parent=35 // pred_fallthru
          _
      $region36: #{tpu_custom_call.1} parent=5 // pred_fallthru
        _
    $region6: #{tpu_custom_call.1} parent=1 // loop_footer
      %s15 = sadd.s32 1, %s11
    $region7: #{tpu_custom_call.1} parent=1 // loop_footer_branch
      %10 = sbr.rel target = $region3
    $region8: #{tpu_custom_call.1} parent=1 // loop_exit
      _
    %284 = vsyncpa [#allocation3], 1
    %s285 = scalar_lea.sflag [#allocation3], 1
    %286 = vsyncpa %s285, 1

</llo_original>
